<compile_context>
chip_gen: v5e
topology: v5e:2x2
jax: 0.10.0
libtpu: 0.0.40
codegen_flags: <defaults>
</compile_context>

<pallas_src>
import math

import jax
import jax.numpy as jnp
from jax import lax
from jax.experimental import pallas as pl
from jax.experimental.pallas import tpu as pltpu


def _round_up(x, m):
    return ((x + m - 1) // m) * m


def make_robust_loss_kernel(*, tm, tn, n_valid, n_pad_cols,
                            shift=1.0, margin=0.2, tau=1.0):
    """Per-(row-block, col-block) streaming-LSE kernel.  Output = per-row lse."""
    # With margin > 0 the diagonal masks always hold, so diag(cost_te) ==
    # diag(cost_im) == d and the wrapper's loss_r = 2*(lse - d + margin) is exact.
    assert margin > 0.0, "simplified diagonal path assumes margin > 0"

    has_pad_cols = n_pad_cols != n_valid
    neg_big = -1e30  # acts as -inf for exp() without inf-inf NaN hazards

    def scale(x):  # x / tau, skipping the multiply when tau == 1
        return x if tau == 1.0 else x * (1.0 / tau)

    def kernel(u_ref, d_ref, yr_ref, vc_ref, yc_ref, out_ref, m_sc, l_sc):
        i = pl.program_id(0)
        j = pl.program_id(1)
        n_j = pl.num_programs(1)

        # ---- init per-row-block streaming-LSE state (once per i, at j == 0) ----
        @pl.when(j == 0)
        def _():
            m_sc[...] = jnp.full(m_sc.shape, neg_big, dtype=jnp.float32)
            l_sc[...] = jnp.zeros(l_sc.shape, dtype=jnp.float32)

        d = d_ref[...]                                           # (tm, 1) f32 = S.diag()

        # ---- S block and neighbor block (bf16 operands pre-cast in wrapper,
        #      contract last dims of both -> no transpose, f32 MXU accumulation)
        S = lax.dot_general(u_ref[...], vc_ref[...],
                            dimension_numbers=(((1,), (1,)), ((), ())),
                            preferred_element_type=jnp.float32)  # (tm, tn)
        yy = lax.dot_general(yr_ref[...], yc_ref[...],
                             dimension_numbers=(((1,), (1,)), ((), ())),
                             preferred_element_type=jnp.float32)  # (tm, tn)

        # exponent of the exp-sum-log term:
        #   neighbor (T=1)  -> 0
        #   otherwise       -> cost_te/tau, cost_te = S if S >= d - margin else S - shift
        e = jnp.where(yy > 0.0,
                      0.0,
                      scale(jnp.where(S >= d - margin, S, S - shift)))

        # diagonal fix-up: exponent -> clamp(d, 0)/tau (T diag is zeroed in the
        # reference).  Only blocks that actually contain a diagonal segment.
        def _fix_diag(ev):
            rg = i * tm + lax.broadcasted_iota(jnp.int32, (tm, tn), 0)
            cg = j * tn + lax.broadcasted_iota(jnp.int32, (tm, tn), 1)
            return jnp.where(rg == cg, scale(jnp.maximum(d, 0.0)), ev)

        has_diag = jnp.logical_and(i * tm < (j + 1) * tn, j * tn < (i + 1) * tm)
        e = lax.cond(has_diag, _fix_diag, lambda ev: ev, e)

        # padded columns exist only in the last column block
        if has_pad_cols:
            def _mask_pad(ev):
                cg = j * tn + lax.broadcasted_iota(jnp.int32, (tm, tn), 1)
                return jnp.where(cg < n_valid, ev, neg_big)
            e = lax.cond(j == n_j - 1, _mask_pad, lambda ev: ev, e)

        # ---- streaming (online) log-sum-exp update ----
        m_prev = m_sc[...]                                       # (tm, 1)
        m_new = jnp.maximum(m_prev, jnp.max(e, axis=1, keepdims=True))
        l_sc[...] = (l_sc[...] * jnp.exp(m_prev - m_new)
                     + jnp.sum(jnp.exp(e - m_new), axis=1, keepdims=True))
        m_sc[...] = m_new

        # ---- finalize: per-row lse for this row block (once per i) ----
        @pl.when(j == n_j - 1)
        def _():
            # tau * log(sum_j exp(E_ij)) -- stabilized, mathematically exact
            out_ref[...] = tau * (m_sc[...] + jnp.log(l_sc[...]))

    return kernel


def robust_loss(u, v, y, config, *, block_rows=256, block_cols=1024,
                shift=1.0, margin=0.2, tau=1.0):
    """Robust_Loss.forward.  u, v: (N, bit) codes; y: (N, C) multi-hot labels."""
    lam = float(config["lambda"])
    n, bit = u.shape
    num_classes = y.shape[1]
    assert margin > 0.0

    # ---- one-time per-row precompute in XLA (hoisted out of the kernel) ----
    u_t = jnp.tanh(u.astype(jnp.float32))
    v_t = jnp.tanh(v.astype(jnp.float32))
    d = jnp.sum(u_t * v_t, axis=1, keepdims=True)                 # (N,1)  S.diag()
    c = 1.0 / math.sqrt(bit)
    q = (jnp.mean((jnp.abs(u_t) - c) ** 2, axis=1)
         + jnp.mean((jnp.abs(v_t) - c) ** 2, axis=1))             # (N,)   Q_loss

    # bf16 MXU operands, cast once here (not per block inside the kernel)
    u_b = u_t.astype(jnp.bfloat16)
    v_b = v_t.astype(jnp.bfloat16)
    y_b = y.astype(jnp.bfloat16)

    # ---- tile selection: short row blocks, wide lane-dense column blocks ----
    tm = int(min(_round_up(block_rows, 8), _round_up(n, 8)))
    tn = int(min(_round_up(block_cols, 128), _round_up(n, 128)))
    # v7x has 2 TensorCores; the "parallel" row axis is what shards across them,
    # so make sure there are at least 2 row blocks whenever N allows it.
    if _round_up(n, tm) // tm < 2 and n > 8:
        tm = _round_up(-(-n // 2), 8)

    n_pad_r = _round_up(n, tm)
    n_pad_c = _round_up(n, tn)

    def pad_rows(x, total):
        p = total - x.shape[0]
        return x if p == 0 else jnp.pad(x, ((0, p), (0, 0)))

    u_r = pad_rows(u_b, n_pad_r)          # row operands (padded to tm multiple)
    d_r = pad_rows(d, n_pad_r)
    y_r = pad_rows(y_b, n_pad_r)
    v_c = pad_rows(v_b, n_pad_c)          # column operands (padded to tn multiple)
    y_c = pad_rows(y_b, n_pad_c)

    grid = (n_pad_r // tm, n_pad_c // tn)

    kernel = make_robust_loss_kernel(tm=tm, tn=tn, n_valid=n, n_pad_cols=n_pad_c,
                                     shift=shift, margin=margin, tau=tau)

    # Rough VMEM budget: (tm,tn) f32 intermediates dominate.  Keep headroom for
    # the compiler and for v7x's 64 MiB / TC physical VMEM.
    est = 10 * tm * tn * 4 + 4 * (tm + tn) * (bit + num_classes) * 2
    vmem_limit = int(min(48 * 2 ** 20, max(16 * 2 ** 20, est * 3 // 2)))

    lse = pl.pallas_call(
        kernel,
        out_shape=jax.ShapeDtypeStruct((n_pad_r, 1), jnp.float32),
        grid_spec=pltpu.PrefetchScalarGridSpec(
            num_scalar_prefetch=0,
            grid=grid,
            in_specs=[
                pl.BlockSpec((tm, bit), lambda i, j: (i, 0)),          # tanh(u) rows
                pl.BlockSpec((tm, 1), lambda i, j: (i, 0)),            # d rows
                pl.BlockSpec((tm, num_classes), lambda i, j: (i, 0)),  # y rows
                pl.BlockSpec((tn, bit), lambda i, j: (j, 0)),          # tanh(v) cols
                pl.BlockSpec((tn, num_classes), lambda i, j: (j, 0)),  # y cols
            ],
            out_specs=pl.BlockSpec((tm, 1), lambda i, j: (i, 0)),
            scratch_shapes=[pltpu.VMEM((tm, 1), jnp.float32)] * 2,     # m, l
        ),
        compiler_params=pltpu.CompilerParams(
            dimension_semantics=("parallel", "arbitrary"),
            vmem_limit_bytes=vmem_limit,
        ),
    )(u_r, d_r, y_r, v_c, y_c)

    lse = lse[:n, 0]
    # Reference uses the same cost_te-based LSE in both halves of loss_r, and
    # with margin > 0 both diagonals equal d, so loss_r = 2*(lse - d + margin).
    loss_r = 2.0 * (lse - d[:, 0] + margin)
    loss = lam * loss_r + (1.0 - lam) * q
    return jnp.mean(loss)


if __name__ == "__main__":
    key = jax.random.PRNGKey(0)
    k_u, k_v, k_y = jax.random.split(key, 3)

    # batch N=200 (not a tile multiple -> exercises row & column padding),
    # hash code length bit=32, num label classes C=8 (multi-hot).
    N, BIT, C = 200, 32, 8
    u = jax.random.normal(k_u, (N, BIT), dtype=jnp.float32)
    v = jax.random.normal(k_v, (N, BIT), dtype=jnp.float32)
    y = (jax.random.uniform(k_y, (N, C)) > 0.5).astype(jnp.float32)

    config = {"lambda": 0.7}

    # block_rows=64, block_cols=128 -> grid (4, 2): exercises the streaming-LSE
    # reduction, the gated diagonal fix-up and the padded-column masking.
    loss = robust_loss(u, v, y, config, block_rows=64, block_cols=128)
    jax.block_until_ready(loss)
    print("KERNEL_OK")
</pallas_src>

<mosaic_0001>
module attributes {stable_mosaic.version = 11 : i64} {
  func.func @kernel(%arg0: i32, %arg1: i32, %arg2: memref<64x32xbf16, #tpu.memory_space<vmem>>, %arg3: memref<64x1xf32, #tpu.memory_space<vmem>>, %arg4: memref<64x8xbf16, #tpu.memory_space<vmem>>, %arg5: memref<128x32xbf16, #tpu.memory_space<vmem>>, %arg6: memref<128x8xbf16, #tpu.memory_space<vmem>>, %arg7: memref<64x1xf32, #tpu.memory_space<vmem>>, %arg8: memref<64x1xf32, #tpu.memory_space<vmem>>, %arg9: memref<64x1xf32, #tpu.memory_space<vmem>>) attributes {dimension_semantics = [#tpu.dimension_semantics<parallel>, #tpu.dimension_semantics<arbitrary>], iteration_bounds = array<i64: 4, 2>, scalar_prefetch = 0 : i64, scratch_operands = 2 : i64, tpu.core_type = #tpu.core_type<tc>, window_params = [{transform_indices = @transform_0, window_bounds = array<i64: 64, 32>}, {transform_indices = @transform_1, window_bounds = array<i64: 64, 1>}, {transform_indices = @transform_2, window_bounds = array<i64: 64, 8>}, {transform_indices = @transform_3, window_bounds = array<i64: 128, 32>}, {transform_indices = @transform_4, window_bounds = array<i64: 128, 8>}, {transform_indices = @transform_5, window_bounds = array<i64: 64, 1>}]} {
    %c0_i32 = arith.constant 0 : i32
    %0 = arith.cmpi eq, %arg1, %c0_i32 : i32
    %1 = arith.extui %0 : i1 to i32
    %c0_i32_0 = arith.constant 0 : i32
    %2 = arith.cmpi ne, %1, %c0_i32_0 : i32
    scf.if %2 {
      %cst_33 = arith.constant -1.000000e+30 : f32
      %56 = vector.broadcast %cst_33 : f32 to vector<64x1xf32>
      %c0_34 = arith.constant 0 : index
      %c0_35 = arith.constant 0 : index
      %57 = vector.load %arg8[%c0_34, %c0_35] : memref<64x1xf32, #tpu.memory_space<vmem>>, vector<64x1xf32>
      tpu.vector_store %arg8[%c0_34, %c0_35], %56 {strides = array<i32>} : memref<64x1xf32, #tpu.memory_space<vmem>>, vector<64x1xf32>,
      %cst_36 = arith.constant 0.000000e+00 : f32
      %58 = vector.broadcast %cst_36 : f32 to vector<64x1xf32>
      %c0_37 = arith.constant 0 : index
      %c0_38 = arith.constant 0 : index
      %59 = vector.load %arg9[%c0_37, %c0_38] : memref<64x1xf32, #tpu.memory_space<vmem>>, vector<64x1xf32>
      tpu.vector_store %arg9[%c0_37, %c0_38], %58 {strides = array<i32>} : memref<64x1xf32, #tpu.memory_space<vmem>>, vector<64x1xf32>,
    } else {
    }
    %c0 = arith.constant 0 : index
    %c0_1 = arith.constant 0 : index
    %3 = vector.load %arg3[%c0, %c0_1] : memref<64x1xf32, #tpu.memory_space<vmem>>, vector<64x1xf32>
    %c0_2 = arith.constant 0 : index
    %c0_3 = arith.constant 0 : index
    %4 = vector.load %arg2[%c0_2, %c0_3] : memref<64x32xbf16, #tpu.memory_space<vmem>>, vector<64x32xbf16>
    %c0_4 = arith.constant 0 : index
    %c0_5 = arith.constant 0 : index
    %5 = vector.load %arg5[%c0_4, %c0_5] : memref<128x32xbf16, #tpu.memory_space<vmem>>, vector<128x32xbf16>
    %cst = arith.constant dense<0.000000e+00> : vector<64x128xf32>
    %6 = tpu.matmul %4, %5, %cst {dimension_numbers = #tpu.dot_dimension_numbers<[1], [1], [0], [0], [0, 0, 1, 0], [], []>} : vector<64x32xbf16>, vector<128x32xbf16>, vector<64x128xf32> -> vector<64x128xf32>
    %c0_6 = arith.constant 0 : index
    %c0_7 = arith.constant 0 : index
    %7 = vector.load %arg4[%c0_6, %c0_7] : memref<64x8xbf16, #tpu.memory_space<vmem>>, vector<64x8xbf16>
    %c0_8 = arith.constant 0 : index
    %c0_9 = arith.constant 0 : index
    %8 = vector.load %arg6[%c0_8, %c0_9] : memref<128x8xbf16, #tpu.memory_space<vmem>>, vector<128x8xbf16>
    %cst_10 = arith.constant dense<0.000000e+00> : vector<64x128xf32>
    %9 = tpu.matmul %7, %8, %cst_10 {dimension_numbers = #tpu.dot_dimension_numbers<[1], [1], [0], [0], [0, 0, 1, 0], [], []>} : vector<64x8xbf16>, vector<128x8xbf16>, vector<64x128xf32> -> vector<64x128xf32>
    %cst_11 = arith.constant 0.000000e+00 : f32
    %10 = vector.broadcast %cst_11 : f32 to vector<64x128xf32>
    %11 = arith.cmpf ogt, %9, %10 : vector<64x128xf32>
    %cst_12 = arith.constant 2.000000e-01 : f32
    %12 = vector.broadcast %cst_12 : f32 to vector<64x1xf32>
    %13 = arith.subf %3, %12 : vector<64x1xf32>
    %14 = vector.broadcast %13 : vector<64x1xf32> to vector<64x128xf32>
    %15 = arith.cmpf oge, %6, %14 : vector<64x128xf32>
    %cst_13 = arith.constant 1.000000e+00 : f32
    %16 = vector.broadcast %cst_13 : f32 to vector<64x128xf32>
    %17 = arith.subf %6, %16 : vector<64x128xf32>
    %18 = arith.select %15, %6, %17 : vector<64x128xi1>, vector<64x128xf32>
    %cst_14 = arith.constant 0.000000e+00 : f32
    %19 = vector.broadcast %cst_14 : f32 to vector<64x128xf32>
    %20 = arith.select %11, %19, %18 : vector<64x128xi1>, vector<64x128xf32>
    %c64_i32 = arith.constant 64 : i32
    %21 = arith.muli %arg0, %c64_i32 : i32
    %c1_i32 = arith.constant 1 : i32
    %22 = arith.addi %arg1, %c1_i32 : i32
    %c128_i32 = arith.constant 128 : i32
    %23 = arith.muli %22, %c128_i32 : i32
    %24 = arith.cmpi slt, %21, %23 : i32
    %c128_i32_15 = arith.constant 128 : i32
    %25 = arith.muli %arg1, %c128_i32_15 : i32
    %c1_i32_16 = arith.constant 1 : i32
    %26 = arith.addi %arg0, %c1_i32_16 : i32
    %c64_i32_17 = arith.constant 64 : i32
    %27 = arith.muli %26, %c64_i32_17 : i32
    %28 = arith.cmpi slt, %25, %27 : i32
    %29 = arith.andi %24, %28 : i1
    %30 = arith.extui %29 : i1 to i32
    %c0_i32_18 = arith.constant 0 : i32
    %31 = arith.cmpi ne, %30, %c0_i32_18 : i32
    %32 = scf.if %31 -> (vector<64x128xf32>) {
      %c64_i32_33 = arith.constant 64 : i32
      %56 = arith.muli %arg0, %c64_i32_33 : i32
      %57 = tpu.iota {dimensions = array<i32: 0>} : vector<64x128xi32>
      %58 = vector.broadcast %56 : i32 to vector<64x128xi32>
      %59 = arith.addi %58, %57 : vector<64x128xi32>
      %c128_i32_34 = arith.constant 128 : i32
      %60 = arith.muli %arg1, %c128_i32_34 : i32
      %61 = tpu.iota {dimensions = array<i32: 1>} : vector<64x128xi32>
      %62 = vector.broadcast %60 : i32 to vector<64x128xi32>
      %63 = arith.addi %62, %61 : vector<64x128xi32>
      %64 = arith.cmpi eq, %59, %63 : vector<64x128xi32>
      %cst_35 = arith.constant 0.000000e+00 : f32
      %65 = vector.broadcast %cst_35 : f32 to vector<64x1xf32>
      %66 = arith.maximumf %3, %65 : vector<64x1xf32>
      %67 = vector.shape_cast %66 : vector<64x1xf32> to vector<64x1xf32>
      %68 = vector.broadcast %67 : vector<64x1xf32> to vector<64x128xf32>
      %69 = arith.select %64, %68, %20 : vector<64x128xi1>, vector<64x128xf32>
      scf.yield %69 : vector<64x128xf32>
    } else {
      scf.yield %20 : vector<64x128xf32>
    }
    %c1_i32_19 = arith.constant 1 : i32
    %33 = arith.cmpi eq, %arg1, %c1_i32_19 : i32
    %34 = arith.extui %33 : i1 to i32
    %c0_i32_20 = arith.constant 0 : i32
    %35 = arith.cmpi ne, %34, %c0_i32_20 : i32
    %36 = scf.if %35 -> (vector<64x128xf32>) {
      %c128_i32_33 = arith.constant 128 : i32
      %56 = arith.muli %arg1, %c128_i32_33 : i32
      %57 = tpu.iota {dimensions = array<i32: 1>} : vector<64x128xi32>
      %58 = vector.broadcast %56 : i32 to vector<64x128xi32>
      %59 = arith.addi %58, %57 : vector<64x128xi32>
      %c200_i32 = arith.constant 200 : i32
      %60 = vector.broadcast %c200_i32 : i32 to vector<64x128xi32>
      %61 = arith.cmpi slt, %59, %60 : vector<64x128xi32>
      %cst_34 = arith.constant -1.000000e+30 : f32
      %62 = vector.broadcast %cst_34 : f32 to vector<64x128xf32>
      %63 = arith.select %61, %32, %62 : vector<64x128xi1>, vector<64x128xf32>
      scf.yield %63 : vector<64x128xf32>
    } else {
      scf.yield %32 : vector<64x128xf32>
    }
    %c0_21 = arith.constant 0 : index
    %c0_22 = arith.constant 0 : index
    %37 = vector.load %arg8[%c0_21, %c0_22] : memref<64x1xf32, #tpu.memory_space<vmem>>, vector<64x1xf32>
    %cst_23 = arith.constant dense<0xFF800000> : vector<64xf32>
    %38 = vector.multi_reduction <maximumf>, %36, %cst_23 [1] : vector<64x128xf32> to vector<64xf32>
    %39 = vector.shape_cast %38 : vector<64xf32> to vector<64x1xf32>
    %40 = arith.maximumf %37, %39 : vector<64x1xf32>
    %c0_24 = arith.constant 0 : index
    %c0_25 = arith.constant 0 : index
    %41 = vector.load %arg9[%c0_24, %c0_25] : memref<64x1xf32, #tpu.memory_space<vmem>>, vector<64x1xf32>
    %42 = arith.subf %37, %40 : vector<64x1xf32>
    %43 = math.exp %42 : vector<64x1xf32>
    %44 = arith.mulf %41, %43 : vector<64x1xf32>
    %45 = vector.broadcast %40 : vector<64x1xf32> to vector<64x128xf32>
    %46 = arith.subf %36, %45 : vector<64x128xf32>
    %47 = math.exp %46 : vector<64x128xf32>
    %cst_26 = arith.constant dense<0.000000e+00> : vector<64xf32>
    %48 = vector.multi_reduction <add>, %47, %cst_26 [1] : vector<64x128xf32> to vector<64xf32>
    %49 = vector.shape_cast %48 : vector<64xf32> to vector<64x1xf32>
    %50 = arith.addf %44, %49 : vector<64x1xf32>
    %c0_27 = arith.constant 0 : index
    %c0_28 = arith.constant 0 : index
    %51 = vector.load %arg9[%c0_27, %c0_28] : memref<64x1xf32, #tpu.memory_space<vmem>>, vector<64x1xf32>
    tpu.vector_store %arg9[%c0_27, %c0_28], %50 {strides = array<i32>} : memref<64x1xf32, #tpu.memory_space<vmem>>, vector<64x1xf32>,
    %c0_29 = arith.constant 0 : index
    %c0_30 = arith.constant 0 : index
    %52 = vector.load %arg8[%c0_29, %c0_30] : memref<64x1xf32, #tpu.memory_space<vmem>>, vector<64x1xf32>
    tpu.vector_store %arg8[%c0_29, %c0_30], %40 {strides = array<i32>} : memref<64x1xf32, #tpu.memory_space<vmem>>, vector<64x1xf32>,
    %c1_i32_31 = arith.constant 1 : i32
    %53 = arith.cmpi eq, %arg1, %c1_i32_31 : i32
    %54 = arith.extui %53 : i1 to i32
    %c0_i32_32 = arith.constant 0 : i32
    %55 = arith.cmpi ne, %54, %c0_i32_32 : i32
    scf.if %55 {
      %c0_33 = arith.constant 0 : index
      %c0_34 = arith.constant 0 : index
      %56 = vector.load %arg8[%c0_33, %c0_34] : memref<64x1xf32, #tpu.memory_space<vmem>>, vector<64x1xf32>
      %c0_35 = arith.constant 0 : index
      %c0_36 = arith.constant 0 : index
      %57 = vector.load %arg9[%c0_35, %c0_36] : memref<64x1xf32, #tpu.memory_space<vmem>>, vector<64x1xf32>
      %58 = math.log %57 : vector<64x1xf32>
      %59 = arith.addf %56, %58 : vector<64x1xf32>
      %cst_37 = arith.constant 1.000000e+00 : f32
      %60 = vector.broadcast %cst_37 : f32 to vector<64x1xf32>
      %61 = arith.mulf %60, %59 : vector<64x1xf32>
      %c0_38 = arith.constant 0 : index
      %c0_39 = arith.constant 0 : index
      %62 = vector.load %arg7[%c0_38, %c0_39] : memref<64x1xf32, #tpu.memory_space<vmem>>, vector<64x1xf32>
      tpu.vector_store %arg7[%c0_38, %c0_39], %61 {strides = array<i32>} : memref<64x1xf32, #tpu.memory_space<vmem>>, vector<64x1xf32>,
    } else {
    }
    return
  }
  func.func @transform_0(%arg0: i32, %arg1: i32) -> (i32, i32) {
    %c0_i32 = arith.constant 0 : i32
    %c0_i32_0 = arith.constant 0 : i32
    return %arg0, %c0_i32 : i32, i32
  }
  func.func @transform_1(%arg0: i32, %arg1: i32) -> (i32, i32) {
    %c0_i32 = arith.constant 0 : i32
    %c0_i32_0 = arith.constant 0 : i32
    return %arg0, %c0_i32 : i32, i32
  }
  func.func @transform_2(%arg0: i32, %arg1: i32) -> (i32, i32) {
    %c0_i32 = arith.constant 0 : i32
    %c0_i32_0 = arith.constant 0 : i32
    return %arg0, %c0_i32 : i32, i32
  }
  func.func @transform_3(%arg0: i32, %arg1: i32) -> (i32, i32) {
    %c0_i32 = arith.constant 0 : i32
    %c0_i32_0 = arith.constant 0 : i32
    return %arg1, %c0_i32 : i32, i32
  }
  func.func @transform_4(%arg0: i32, %arg1: i32) -> (i32, i32) {
    %c0_i32 = arith.constant 0 : i32
    %c0_i32_0 = arith.constant 0 : i32
    return %arg1, %c0_i32 : i32, i32
  }
  func.func @transform_5(%arg0: i32, %arg1: i32) -> (i32, i32) {
    %c0_i32 = arith.constant 0 : i32
    %c0_i32_0 = arith.constant 0 : i32
    return %arg0, %c0_i32 : i32, i32
  }
}

</mosaic_0001>

<llo_original>
// kernel: tpu_custom_call.1
$region0: #{tpu_custom_call.1}
  #allocation0 [shape = 'u32[]', space=smem, size = 0x4, offset = 0x4, fixed_abs, tag = 'smem constant byte address 0x4 - core index']
  #allocation1 [shape = 'u32[72,128]{1,0:T(1,128)}', space=vmem, size = 0x9000, scoped, tag = 'internal scratch']
  #allocation2 [shape = 'f32[64,1]{1,0:T(8,128)}', space=vmem, size = 0x8000, scoped, tag = 'scratch operand']
  #allocation3 [shape = 'f32[64,1]{1,0:T(8,128)}', space=vmem, size = 0x8000, scoped, tag = 'scratch operand']
  %s0 = inlined_call_operand.vmem [shape: bf16[256,32], index: 0, kind: input, shape index: {}]
  %s1 = inlined_call_operand.vmem [shape: f32[256,1], index: 1, kind: input, shape index: {}]
  %s2 = inlined_call_operand.vmem [shape: bf16[256,8], index: 2, kind: input, shape index: {}]
  %s3 = inlined_call_operand.vmem [shape: bf16[256,32], index: 3, kind: input, shape index: {}]
  %s4 = inlined_call_operand.vmem [shape: bf16[256,8], index: 4, kind: input, shape index: {}]
  %s5 = inlined_call_operand.vmem [shape: f32[256,1], index: 5, kind: output, shape index: {}]
  %s6 = sld [smem:[#allocation0]]
  $region77: #{tpu_custom_call.1} parent=0
    _
  %s8 = ssub.s32 1, %s6
  %s9 = scalar_select 0, %s8, %s6
  loop: start=0, step=1, limit=10
  $region2: #{tpu_custom_call.1} parent=0 // loop_pre_header
    _
  $region3: #{tpu_custom_call.1} parent=0 // loop_header
    %s11 = sphi 0, %s15
    %p12 = scmp.ge.s32.totalorder %s11, 10
    %s18 = sphi 0, %s30
    %s19 = sphi 0, %s26
    %s20 = sphi 0, %s18
    %s21 = sphi 0, %s19
    %s22 = sphi 0, %s20
    %s23 = sphi 0, %s21
    %s33 = sphi 0, %s35
    %s36 = sphi 0, %s33
    %s37 = sphi 0, %s36
    %s53 = sphi 0, %s37
    %s59 = sphi 0, %s61
    %s62 = sphi 0, %s59
    %s63 = sphi 0, %s62
    %s79 = sphi 0, %s63
    %s85 = sphi 0, %s87
    %s88 = sphi 0, %s85
    %s89 = sphi 0, %s88
    %s105 = sphi 0, %s89
    %s111 = sphi 0, %s113
    %s114 = sphi 0, %s111
    %s115 = sphi 0, %s114
    %s131 = sphi 0, %s115
    %s137 = sphi 0, %s139
    %s140 = sphi 0, %s137
    %s141 = sphi 0, %s140
    %s157 = sphi 0, %s141
    %s163 = sphi 0, %s165
    %s166 = sphi 0, %s163
    %s167 = sphi 0, %s166
    %s183 = sphi 0, %s167
  $region4: #{tpu_custom_call.1} parent=0 // loop_header_branch
    %14 = sbr.rel (%p12) target = $region8
  $region5: #{tpu_custom_call.1} parent=0 // loop_body
    %s16 = ssub.s32 %s11, 1
    %s17 = ssub.s32 %s11, 2
    %s24 = sadd.s32 1, %s19
    %p25 = scmp.ge.s32.totalorder %s24, 2
    %s26 = scalar_select %p25, 0, %s24
    %s27 = sadd.s32 1, %s18
    %s28 = scalar_select %p25, %s27, %s18
    %p29 = scmp.ge.s32.totalorder %s28, 4
    %s30 = scalar_select %p29, 0, %s28
    %s31 = ssub.s32 %s18, %s30
    %p32 = scmp.eq.s32.totalorder %s31, 0
    %s34 = sadd.s32 %s33, 1
    %s35 = scalar_select %p32, %s33, %s34
    %p38 = pneg %p32
    %p39 = scmp.eq.s32.totalorder %s11, 7
    %p40 = por %p38, %p39
    %p41 = scmp.ne.s32.totalorder %s33, %s36
    %p42 = scmp.eq.s32.totalorder %s11, 0
    %p43 = por %p41, %p42
    %p44 = scmp.ne.s32.totalorder %s33, %s36
    %p45 = scmp.eq.s32.totalorder %s16, 7
    %p46 = por %p44, %p45
    %p47 = scmp.ne.s32.totalorder %s36, %s37
    %p48 = scmp.eq.s32.totalorder %s16, 0
    %p49 = por %p47, %p48
    %p50 = scmp.ne.s32.totalorder %s36, %s37
    %p51 = scmp.eq.s32.totalorder %s17, 7
    %p52 = por %p50, %p51
    %p54 = scmp.ne.s32.totalorder %s37, %s53
    %p55 = scmp.eq.s32.totalorder %s17, 0
    %p56 = por %p54, %p55
    %s57 = ssub.s32 %s18, %s30
    %p58 = scmp.eq.s32.totalorder %s57, 0
    %s60 = sadd.s32 %s59, 1
    %s61 = scalar_select %p58, %s59, %s60
    %p64 = pneg %p58
    %p65 = scmp.eq.s32.totalorder %s11, 7
    %p66 = por %p64, %p65
    %p67 = scmp.ne.s32.totalorder %s59, %s62
    %p68 = scmp.eq.s32.totalorder %s11, 0
    %p69 = por %p67, %p68
    %p70 = scmp.ne.s32.totalorder %s59, %s62
    %p71 = scmp.eq.s32.totalorder %s16, 7
    %p72 = por %p70, %p71
    %p73 = scmp.ne.s32.totalorder %s62, %s63
    %p74 = scmp.eq.s32.totalorder %s16, 0
    %p75 = por %p73, %p74
    %p76 = scmp.ne.s32.totalorder %s62, %s63
    %p77 = scmp.eq.s32.totalorder %s17, 7
    %p78 = por %p76, %p77
    %p80 = scmp.ne.s32.totalorder %s63, %s79
    %p81 = scmp.eq.s32.totalorder %s17, 0
    %p82 = por %p80, %p81
    %s83 = ssub.s32 %s18, %s30
    %p84 = scmp.eq.s32.totalorder %s83, 0
    %s86 = sadd.s32 %s85, 1
    %s87 = scalar_select %p84, %s85, %s86
    %p90 = pneg %p84
    %p91 = scmp.eq.s32.totalorder %s11, 7
    %p92 = por %p90, %p91
    %p93 = scmp.ne.s32.totalorder %s85, %s88
    %p94 = scmp.eq.s32.totalorder %s11, 0
    %p95 = por %p93, %p94
    %p96 = scmp.ne.s32.totalorder %s85, %s88
    %p97 = scmp.eq.s32.totalorder %s16, 7
    %p98 = por %p96, %p97
    %p99 = scmp.ne.s32.totalorder %s88, %s89
    %p100 = scmp.eq.s32.totalorder %s16, 0
    %p101 = por %p99, %p100
    %p102 = scmp.ne.s32.totalorder %s88, %s89
    %p103 = scmp.eq.s32.totalorder %s17, 7
    %p104 = por %p102, %p103
    %p106 = scmp.ne.s32.totalorder %s89, %s105
    %p107 = scmp.eq.s32.totalorder %s17, 0
    %p108 = por %p106, %p107
    %s109 = ssub.s32 %s19, %s26
    %p110 = scmp.eq.s32.totalorder %s109, 0
    %s112 = sadd.s32 %s111, 1
    %s113 = scalar_select %p110, %s111, %s112
    %p116 = pneg %p110
    %p117 = scmp.eq.s32.totalorder %s11, 7
    %p118 = por %p116, %p117
    %p119 = scmp.ne.s32.totalorder %s111, %s114
    %p120 = scmp.eq.s32.totalorder %s11, 0
    %p121 = por %p119, %p120
    %p122 = scmp.ne.s32.totalorder %s111, %s114
    %p123 = scmp.eq.s32.totalorder %s16, 7
    %p124 = por %p122, %p123
    %p125 = scmp.ne.s32.totalorder %s114, %s115
    %p126 = scmp.eq.s32.totalorder %s16, 0
    %p127 = por %p125, %p126
    %p128 = scmp.ne.s32.totalorder %s114, %s115
    %p129 = scmp.eq.s32.totalorder %s17, 7
    %p130 = por %p128, %p129
    %p132 = scmp.ne.s32.totalorder %s115, %s131
    %p133 = scmp.eq.s32.totalorder %s17, 0
    %p134 = por %p132, %p133
    %s135 = ssub.s32 %s19, %s26
    %p136 = scmp.eq.s32.totalorder %s135, 0
    %s138 = sadd.s32 %s137, 1
    %s139 = scalar_select %p136, %s137, %s138
    %p142 = pneg %p136
    %p143 = scmp.eq.s32.totalorder %s11, 7
    %p144 = por %p142, %p143
    %p145 = scmp.ne.s32.totalorder %s137, %s140
    %p146 = scmp.eq.s32.totalorder %s11, 0
    %p147 = por %p145, %p146
    %p148 = scmp.ne.s32.totalorder %s137, %s140
    %p149 = scmp.eq.s32.totalorder %s16, 7
    %p150 = por %p148, %p149
    %p151 = scmp.ne.s32.totalorder %s140, %s141
    %p152 = scmp.eq.s32.totalorder %s16, 0
    %p153 = por %p151, %p152
    %p154 = scmp.ne.s32.totalorder %s140, %s141
    %p155 = scmp.eq.s32.totalorder %s17, 7
    %p156 = por %p154, %p155
    %p158 = scmp.ne.s32.totalorder %s141, %s157
    %p159 = scmp.eq.s32.totalorder %s17, 0
    %p160 = por %p158, %p159
    %s161 = ssub.s32 %s18, %s30
    %p162 = scmp.eq.s32.totalorder %s161, 0
    %s164 = sadd.s32 %s163, 1
    %s165 = scalar_select %p162, %s163, %s164
    %p168 = pneg %p162
    %p169 = scmp.eq.s32.totalorder %s11, 7
    %p170 = por %p168, %p169
    %p171 = scmp.ne.s32.totalorder %s163, %s166
    %p172 = scmp.eq.s32.totalorder %s11, 0
    %p173 = por %p171, %p172
    %p174 = scmp.ne.s32.totalorder %s163, %s166
    %p175 = scmp.eq.s32.totalorder %s16, 7
    %p176 = por %p174, %p175
    %p177 = scmp.ne.s32.totalorder %s166, %s167
    %p178 = scmp.eq.s32.totalorder %s16, 0
    %p179 = por %p177, %p178
    %p180 = scmp.ne.s32.totalorder %s166, %s167
    %p181 = scmp.eq.s32.totalorder %s17, 7
    %p182 = por %p180, %p181
    %p184 = scmp.ne.s32.totalorder %s167, %s183
    %p185 = scmp.eq.s32.totalorder %s17, 0
    %p186 = por %p184, %p185
    %p187 = scmp.le.s32.totalorder 1, %s11
    %p188 = scmp.lt.s32.totalorder %s11, 9
    %p189 = pnand %p187, %p188
    %p190 = pneg %p189
    // Predicated region
    $region9: #{tpu_custom_call.1} parent=5 // pred_check
      _
    $region10: #{tpu_custom_call.1} parent=5 // pred_check_branch
      %192 = sbr.rel (%p189) target = $region12
    $region11: #{tpu_custom_call.1} parent=5 // pred_region
      %s193 = ssub.s32 %s11, 1
    $region12: #{tpu_custom_call.1} parent=5 // pred_fallthru
      _
    %p194 = scmp.lt.s32.totalorder %s11, 8
    // Predicated region
    $region13: #{tpu_custom_call.1} parent=5 // pred_check
      %p195 = pneg %p194
    $region14: #{tpu_custom_call.1} parent=5 // pred_check_branch
      %197 = sbr.rel (%p195) target = $region16
    $region15: #{tpu_custom_call.1} parent=5 // pred_region
      // Predicated region
      $region17: #{tpu_custom_call.1} parent=15 // pred_check
        %p198 = pneg %p43
      $region18: #{tpu_custom_call.1} parent=15 // pred_check_branch
        %200 = sbr.rel (%p198) target = $region20
      $region19: #{tpu_custom_call.1} parent=15 // pred_region
        %s201 = smul.u32 8, %s18
        %p202 = scmp.lt.s32.totalorder %s201, 31
        %s203 = scalar_select %p202, %s201, 31
        %s204 = smul.addr %s203, 4
        %s205 = scalar_lea.vmem %s0, %s204
        %s206 = smul.u32 8, %s18
      $region20: #{tpu_custom_call.1} parent=15 // pred_fallthru
        _
      // Predicated region
      $region21: #{tpu_custom_call.1} parent=15 // pred_check
        %p207 = pneg %p69
      $region22: #{tpu_custom_call.1} parent=15 // pred_check_branch
        %209 = sbr.rel (%p207) target = $region24
      $region23: #{tpu_custom_call.1} parent=15 // pred_region
        %s210 = smul.u32 8, %s18
        %p211 = scmp.lt.s32.totalorder %s210, 31
        %s212 = scalar_select %p211, %s210, 31
        %s213 = smul.addr %s212, 8
        %s214 = scalar_lea.vmem %s1, %s213
        %s215 = smul.u32 8, %s18
      $region24: #{tpu_custom_call.1} parent=15 // pred_fallthru
        _
      // Predicated region
      $region25: #{tpu_custom_call.1} parent=15 // pred_check
        %p216 = pneg %p95
      $region26: #{tpu_custom_call.1} parent=15 // pred_check_branch
        %218 = sbr.rel (%p216) target = $region28
      $region27: #{tpu_custom_call.1} parent=15 // pred_region
        %s219 = smul.u32 8, %s18
        %p220 = scmp.lt.s32.totalorder %s219, 31
        %s221 = scalar_select %p220, %s219, 31
        %s222 = smul.addr %s221, 4
        %s223 = scalar_lea.vmem %s2, %s222
        %s224 = smul.u32 8, %s18
      $region28: #{tpu_custom_call.1} parent=15 // pred_fallthru
        _
      // Predicated region
      $region29: #{tpu_custom_call.1} parent=15 // pred_check
        %p225 = pneg %p121
      $region30: #{tpu_custom_call.1} parent=15 // pred_check_branch
        %227 = sbr.rel (%p225) target = $region32
      $region31: #{tpu_custom_call.1} parent=15 // pred_region
        %s228 = smul.u32 16, %s19
        %p229 = scmp.lt.s32.totalorder %s228, 31
        %s230 = scalar_select %p229, %s228, 31
        %s231 = smul.addr %s230, 4
        %s232 = scalar_lea.vmem %s3, %s231
        %s233 = smul.u32 16, %s19
      $region32: #{tpu_custom_call.1} parent=15 // pred_fallthru
        _
      // Predicated region
      $region33: #{tpu_custom_call.1} parent=15 // pred_check
        %p234 = pneg %p147
      $region34: #{tpu_custom_call.1} parent=15 // pred_check_branch
        %236 = sbr.rel (%p234) target = $region36
      $region35: #{tpu_custom_call.1} parent=15 // pred_region
        %s237 = smul.u32 16, %s19
        %p238 = scmp.lt.s32.totalorder %s237, 31
        %s239 = scalar_select %p238, %s237, 31
        %s240 = smul.addr %s239, 4
        %s241 = scalar_lea.vmem %s4, %s240
        %s242 = smul.u32 16, %s19
      $region36: #{tpu_custom_call.1} parent=15 // pred_fallthru
        _
    $region16: #{tpu_custom_call.1} parent=5 // pred_fallthru
      _
    %p243 = scmp.le.s32.totalorder 1, %s11
    %p244 = scmp.lt.s32.totalorder %s11, 9
    %p245 = pnand %p243, %p244
    %p246 = pneg %p245
    // Predicated region
    $region37: #{tpu_custom_call.1} parent=5 // pred_check
      _
    $region38: #{tpu_custom_call.1} parent=5 // pred_check_branch
      %248 = sbr.rel (%p245) target = $region40
    $region39: #{tpu_custom_call.1} parent=5 // pred_region
      %s249 = ssub.s32 %s11, 1
      %s250 = smul.u32 8, %s20
      %p251 = scmp.lt.s32.totalorder %s250, 31
      %s252 = scalar_select %p251, %s250, 31
      %s253 = smul.addr %s252, 4
      %s254 = scalar_lea.vmem %s0, %s253
      %p255 = pneg %p49
      %p256 = pneg %p46
      %s257 = smul.u32 8, %s20
      %p258 = scmp.lt.s32.totalorder %s257, 31
      %s259 = scalar_select %p258, %s257, 31
      %s260 = smul.addr %s259, 8
      %s261 = scalar_lea.vmem %s1, %s260
      %p262 = pneg %p75
      %p263 = pneg %p72
      %s264 = smul.u32 8, %s20
      %p265 = scmp.lt.s32.totalorder %s264, 31
      %s266 = scalar_select %p265, %s264, 31
      %s267 = smul.addr %s266, 4
      %s268 = scalar_lea.vmem %s2, %s267
      %p269 = pneg %p101
      %p270 = pneg %p98
      %s271 = smul.u32 16, %s21
      %p272 = scmp.lt.s32.totalorder %s271, 31
      %s273 = scalar_select %p272, %s271, 31
      %s274 = smul.addr %s273, 4
      %s275 = scalar_lea.vmem %s3, %s274
      %p276 = pneg %p127
      %p277 = pneg %p124
      %s278 = smul.u32 16, %s21
      %p279 = scmp.lt.s32.totalorder %s278, 31
      %s280 = scalar_select %p279, %s278, 31
      %s281 = smul.addr %s280, 4
      %s282 = scalar_lea.vmem %s4, %s281
      %p283 = pneg %p153
      %p284 = pneg %p150
      %p285 = pneg %p179
      %p286 = pneg %p176
      %s287 = smul.u32 8, %s20
      %p288 = scmp.lt.s32.totalorder %s287, 31
      %s289 = scalar_select %p288, %s287, 31
      %s290 = smul.addr %s289, 8
      %s291 = scalar_lea.vmem %s5, %s290
      %s292 = smul.u32 8, %s20
      %p293 = scmp.lt.s32.totalorder %s292, 31
      %s294 = scalar_select %p293, %s292, 31
      %s295 = smul.addr %s294, 4
      %s296 = scalar_lea.vmem %s0, %s295
      %s297 = smul.u32 8, %s20
      %s298 = smul.u32 8, %s20
      %p299 = scmp.lt.s32.totalorder %s298, 31
      %s300 = scalar_select %p299, %s298, 31
      %s301 = smul.addr %s300, 8
      %s302 = scalar_lea.vmem %s1, %s301
      %s303 = smul.u32 8, %s20
      %s304 = smul.u32 8, %s20
      %p305 = scmp.lt.s32.totalorder %s304, 31
      %s306 = scalar_select %p305, %s304, 31
      %s307 = smul.addr %s306, 4
      %s308 = scalar_lea.vmem %s2, %s307
      %s309 = smul.u32 8, %s20
      %s310 = smul.u32 16, %s21
      %p311 = scmp.lt.s32.totalorder %s310, 31
      %s312 = scalar_select %p311, %s310, 31
      %s313 = smul.addr %s312, 4
      %s314 = scalar_lea.vmem %s3, %s313
      %s315 = smul.u32 16, %s21
      %s316 = smul.u32 16, %s21
      %p317 = scmp.lt.s32.totalorder %s316, 31
      %s318 = scalar_select %p317, %s316, 31
      %s319 = smul.addr %s318, 4
      %s320 = scalar_lea.vmem %s4, %s319
      %s321 = smul.u32 16, %s21
      %s322 = smul.u32 8, %s20
      %p323 = scmp.lt.s32.totalorder %s322, 31
      %s324 = scalar_select %p323, %s322, 31
      %s325 = smul.addr %s324, 8
      %s326 = scalar_lea.vmem %s5, %s325
      %s327 = smul.u32 8, %s20
      %p328 = scmp.eq.s32.totalorder %s21, 0
      // Predicated region
      $region41: #{tpu_custom_call.1} parent=39 // pred_check
        %p329 = pneg %p328
      $region42: #{tpu_custom_call.1} parent=39 // pred_check_branch
        %331 = sbr.rel (%p329) target = $region44
      $region43: #{tpu_custom_call.1} parent=39 // pred_region
        %vm332 = vcmask 7168
        %333 = vst.msk [vmem:[#allocation2] sm:$0xff] %vm332, -1e+30
        %334 = vst.msk [vmem:[#allocation2 + $0x8] sm:$0xff] %vm332, -1e+30
        %335 = vst.msk [vmem:[#allocation2 + $0x10] sm:$0xff] %vm332, -1e+30
        %336 = vst.msk [vmem:[#allocation2 + $0x18] sm:$0xff] %vm332, -1e+30
        %337 = vst.msk [vmem:[#allocation2 + $0x20] sm:$0xff] %vm332, -1e+30
        %338 = vst.msk [vmem:[#allocation2 + $0x28] sm:$0xff] %vm332, -1e+30
        %339 = vst.msk [vmem:[#allocation2 + $0x30] sm:$0xff] %vm332, -1e+30
        %340 = vst.msk [vmem:[#allocation2 + $0x38] sm:$0xff] %vm332, -1e+30
        %341 = vst.msk [vmem:[#allocation3] sm:$0xff] %vm332, 0.0
        %342 = vst.msk [vmem:[#allocation3 + $0x8] sm:$0xff] %vm332, 0.0
        %343 = vst.msk [vmem:[#allocation3 + $0x10] sm:$0xff] %vm332, 0.0
        %344 = vst.msk [vmem:[#allocation3 + $0x18] sm:$0xff] %vm332, 0.0
        %345 = vst.msk [vmem:[#allocation3 + $0x20] sm:$0xff] %vm332, 0.0
        %346 = vst.msk [vmem:[#allocation3 + $0x28] sm:$0xff] %vm332, 0.0
        %347 = vst.msk [vmem:[#allocation3 + $0x30] sm:$0xff] %vm332, 0.0
        %348 = vst.msk [vmem:[#allocation3 + $0x38] sm:$0xff] %vm332, 0.0
      $region44: #{tpu_custom_call.1} parent=39 // pred_fallthru
        _
      %v349 = vld [vmem:[%s302] sm:$0xff]
      %v350 = vld [vmem:[%s302 + $0x8] sm:$0xff]
      %v351 = vld [vmem:[%s302 + $0x10] sm:$0xff]
      %v352 = vld [vmem:[%s302 + $0x18] sm:$0xff]
      %v353 = vld [vmem:[%s302 + $0x20] sm:$0xff]
      %v354 = vld [vmem:[%s302 + $0x28] sm:$0xff]
      %v355 = vld [vmem:[%s302 + $0x30] sm:$0xff]
      %v356 = vld [vmem:[%s302 + $0x38] sm:$0xff]
      %v357 = vld [vmem:[%s296] sm:$0xf]
      %v358 = vld [vmem:[%s296 + $0x4] sm:$0xf]
      %v359 = vld [vmem:[%s296 + $0x8] sm:$0xf]
      %v360 = vld [vmem:[%s296 + $0xc] sm:$0xf]
      %v361 = vld [vmem:[%s296 + $0x10] sm:$0xf]
      %v362 = vld [vmem:[%s296 + $0x14] sm:$0xf]
      %v363 = vld [vmem:[%s296 + $0x18] sm:$0xf]
      %v364 = vld [vmem:[%s296 + $0x1c] sm:$0xf]
      %v365 = vld [vmem:[%s314] sm:$0xf]
      %v366 = vld [vmem:[%s314 + $0x4] sm:$0xf]
      %v367 = vld [vmem:[%s314 + $0x8] sm:$0xf]
      %v368 = vld [vmem:[%s314 + $0xc] sm:$0xf]
      %v369 = vld [vmem:[%s314 + $0x10] sm:$0xf]
      %v370 = vld [vmem:[%s314 + $0x14] sm:$0xf]
      %v371 = vld [vmem:[%s314 + $0x18] sm:$0xf]
      %v372 = vld [vmem:[%s314 + $0x1c] sm:$0xf]
      %v373 = vld [vmem:[%s314 + $0x20] sm:$0xf]
      %v374 = vld [vmem:[%s314 + $0x24] sm:$0xf]
      %v375 = vld [vmem:[%s314 + $0x28] sm:$0xf]
      %v376 = vld [vmem:[%s314 + $0x2c] sm:$0xf]
      %v377 = vld [vmem:[%s314 + $0x30] sm:$0xf]
      %v378 = vld [vmem:[%s314 + $0x34] sm:$0xf]
      %v379 = vld [vmem:[%s314 + $0x38] sm:$0xf]
      %v380 = vld [vmem:[%s314 + $0x3c] sm:$0xf]
      %v389 = vunpack.c.l.b16 %v357
      %v390 = vunpack.c.l.b16 %v358
      %v391 = vunpack.c.l.b16 %v359
      %v392 = vunpack.c.l.b16 %v360
      %v393 = vunpack.c.l.b16 %v361
      %v394 = vunpack.c.l.b16 %v362
      %v395 = vunpack.c.l.b16 %v363
      %v396 = vunpack.c.l.b16 %v364
      %v397 = vpack.c.b16 %v390, %v389
      %v398 = vpack.c.b16 %v392, %v391
      %v399 = vpack.c.b16 %v394, %v393
      %v400 = vpack.c.b16 %v396, %v395
      %v417 = vunpack.c.l.b16 %v365
      %v418 = vunpack.c.l.b16 %v366
      %v419 = vunpack.c.l.b16 %v367
      %v420 = vunpack.c.l.b16 %v368
      %v421 = vunpack.c.l.b16 %v369
      %v422 = vunpack.c.l.b16 %v370
      %v423 = vunpack.c.l.b16 %v371
      %v424 = vunpack.c.l.b16 %v372
      %v425 = vunpack.c.l.b16 %v373
      %v426 = vunpack.c.l.b16 %v374
      %v427 = vunpack.c.l.b16 %v375
      %v428 = vunpack.c.l.b16 %v376
      %v429 = vunpack.c.l.b16 %v377
      %v430 = vunpack.c.l.b16 %v378
      %v431 = vunpack.c.l.b16 %v379
      %v432 = vunpack.c.l.b16 %v380
      %v433 = vpack.c.b16 %v418, %v417
      %v434 = vpack.c.b16 %v420, %v419
      %v435 = vpack.c.b16 %v422, %v421
      %v436 = vpack.c.b16 %v424, %v423
      %v437 = vpack.c.b16 %v426, %v425
      %v438 = vpack.c.b16 %v428, %v427
      %v439 = vpack.c.b16 %v430, %v429
      %v440 = vpack.c.b16 %v432, %v431
      %vm441 = vcmask 261120
      %v443 = vsel %vm441, %v397, 0
      %v446 = vsel %vm441, %v398, 0
      %v449 = vsel %vm441, %v399, 0
      %v452 = vsel %vm441, %v400, 0
      %v455 = vsel %vm441, %v433, 0
      %v458 = vsel %vm441, %v434, 0
      %v461 = vsel %vm441, %v435, 0
      %v464 = vsel %vm441, %v436, 0
      %v467 = vsel %vm441, %v437, 0
      %v470 = vsel %vm441, %v438, 0
      %v473 = vsel %vm441, %v439, 0
      %v476 = vsel %vm441, %v440, 0
      %478 = vmatpush.bf16.xpose.msra.mxu0 %v476
      %479 = vmatpush.bf16.xpose.msra.mxu0 %v473
      %480 = vmatpush.bf16.xpose.msra.mxu0 %v470
      %481 = vmatpush.bf16.xpose.msra.mxu0 %v467
      %482 = vmatpush.bf16.xpose.msra.mxu0 %v464
      %483 = vmatpush.bf16.xpose.msra.mxu0 %v461
      %484 = vmatpush.bf16.xpose.msra.mxu0 %v458
      %485 = vmatpush.bf16.xpose.msra.mxu0 %v455
      %486 = vmatmul.bf16.gmra.mxu0 %v443
      %v487 = vpop.f32.mrf.mxu0
      %v488 = vadd.f32 0.0, %v487
      %v489 = vpop.f32.mrf.mxu0
      %v490 = vadd.f32 0.0, %v489
      %491 = vmatmul.bf16.gmra.mxu0 %v446
      %v492 = vpop.f32.mrf.mxu0
      %v493 = vadd.f32 0.0, %v492
      %v494 = vpop.f32.mrf.mxu0
      %v495 = vadd.f32 0.0, %v494
      %496 = vmatmul.bf16.gmra.mxu0 %v449
      %v497 = vpop.f32.mrf.mxu0
      %v498 = vadd.f32 0.0, %v497
      %v499 = vpop.f32.mrf.mxu0
      %v500 = vadd.f32 0.0, %v499
      %501 = vmatmul.bf16.gmra.mxu0 %v452
      %v502 = vpop.f32.mrf.mxu0
      %v503 = vadd.f32 0.0, %v502
      %v504 = vpop.f32.mrf.mxu0
      %v505 = vadd.f32 0.0, %v504
      %506 = vdwg.mxu0
      %v507 = vld [vmem:[%s308] sm:$0xf]
      %v508 = vld [vmem:[%s308 + $0x4] sm:$0xf]
      %v509 = vld [vmem:[%s308 + $0x8] sm:$0xf]
      %v510 = vld [vmem:[%s308 + $0xc] sm:$0xf]
      %v511 = vld [vmem:[%s308 + $0x10] sm:$0xf]
      %v512 = vld [vmem:[%s308 + $0x14] sm:$0xf]
      %v513 = vld [vmem:[%s308 + $0x18] sm:$0xf]
      %v514 = vld [vmem:[%s308 + $0x1c] sm:$0xf]
      %v515 = vld [vmem:[%s320] sm:$0xf]
      %v516 = vld [vmem:[%s320 + $0x4] sm:$0xf]
      %v517 = vld [vmem:[%s320 + $0x8] sm:$0xf]
      %v518 = vld [vmem:[%s320 + $0xc] sm:$0xf]
      %v519 = vld [vmem:[%s320 + $0x10] sm:$0xf]
      %v520 = vld [vmem:[%s320 + $0x14] sm:$0xf]
      %v521 = vld [vmem:[%s320 + $0x18] sm:$0xf]
      %v522 = vld [vmem:[%s320 + $0x1c] sm:$0xf]
      %v523 = vld [vmem:[%s320 + $0x20] sm:$0xf]
      %v524 = vld [vmem:[%s320 + $0x24] sm:$0xf]
      %v525 = vld [vmem:[%s320 + $0x28] sm:$0xf]
      %v526 = vld [vmem:[%s320 + $0x2c] sm:$0xf]
      %v527 = vld [vmem:[%s320 + $0x30] sm:$0xf]
      %v528 = vld [vmem:[%s320 + $0x34] sm:$0xf]
      %v529 = vld [vmem:[%s320 + $0x38] sm:$0xf]
      %v530 = vld [vmem:[%s320 + $0x3c] sm:$0xf]
      %v539 = vunpack.c.l.b16 %v507
      %v540 = vunpack.c.l.b16 %v508
      %v541 = vunpack.c.l.b16 %v509
      %v542 = vunpack.c.l.b16 %v510
      %v543 = vunpack.c.l.b16 %v511
      %v544 = vunpack.c.l.b16 %v512
      %v545 = vunpack.c.l.b16 %v513
      %v546 = vunpack.c.l.b16 %v514
      %v547 = vpack.c.b16 %v540, %v539
      %v548 = vpack.c.b16 %v542, %v541
      %v549 = vpack.c.b16 %v544, %v543
      %v550 = vpack.c.b16 %v546, %v545
      %v567 = vunpack.c.l.b16 %v515
      %v568 = vunpack.c.l.b16 %v516
      %v569 = vunpack.c.l.b16 %v517
      %v570 = vunpack.c.l.b16 %v518
      %v571 = vunpack.c.l.b16 %v519
      %v572 = vunpack.c.l.b16 %v520
      %v573 = vunpack.c.l.b16 %v521
      %v574 = vunpack.c.l.b16 %v522
      %v575 = vunpack.c.l.b16 %v523
      %v576 = vunpack.c.l.b16 %v524
      %v577 = vunpack.c.l.b16 %v525
      %v578 = vunpack.c.l.b16 %v526
      %v579 = vunpack.c.l.b16 %v527
      %v580 = vunpack.c.l.b16 %v528
      %v581 = vunpack.c.l.b16 %v529
      %v582 = vunpack.c.l.b16 %v530
      %v583 = vpack.c.b16 %v568, %v567
      %v584 = vpack.c.b16 %v570, %v569
      %v585 = vpack.c.b16 %v572, %v571
      %v586 = vpack.c.b16 %v574, %v573
      %v587 = vpack.c.b16 %v576, %v575
      %v588 = vpack.c.b16 %v578, %v577
      %v589 = vpack.c.b16 %v580, %v579
      %v590 = vpack.c.b16 %v582, %v581
      %vm591 = vcmask 64512
      %v593 = vsel %vm591, %v547, 0
      %v596 = vsel %vm591, %v548, 0
      %v599 = vsel %vm591, %v549, 0
      %v602 = vsel %vm591, %v550, 0
      %v605 = vsel %vm591, %v583, 0
      %v608 = vsel %vm591, %v584, 0
      %v611 = vsel %vm591, %v585, 0
      %v614 = vsel %vm591, %v586, 0
      %v617 = vsel %vm591, %v587, 0
      %v620 = vsel %vm591, %v588, 0
      %v623 = vsel %vm591, %v589, 0
      %v626 = vsel %vm591, %v590, 0
      %628 = vmatpush.bf16.xpose.msra.mxu0 %v626
      %629 = vmatpush.bf16.xpose.msra.mxu0 %v623
      %630 = vmatpush.bf16.xpose.msra.mxu0 %v620
      %631 = vmatpush.bf16.xpose.msra.mxu0 %v617
      %632 = vmatpush.bf16.xpose.msra.mxu0 %v614
      %633 = vmatpush.bf16.xpose.msra.mxu0 %v611
      %634 = vmatpush.bf16.xpose.msra.mxu0 %v608
      %635 = vmatpush.bf16.xpose.msra.mxu0 %v605
      %636 = vmatmul.bf16.gmra.mxu0 %v593
      %v637 = vpop.f32.mrf.mxu0
      %v638 = vadd.f32 0.0, %v637
      %v639 = vpop.f32.mrf.mxu0
      %v640 = vadd.f32 0.0, %v639
      %641 = vmatmul.bf16.gmra.mxu0 %v596
      %v642 = vpop.f32.mrf.mxu0
      %v643 = vadd.f32 0.0, %v642
      %v644 = vpop.f32.mrf.mxu0
      %v645 = vadd.f32 0.0, %v644
      %646 = vmatmul.bf16.gmra.mxu0 %v599
      %v647 = vpop.f32.mrf.mxu0
      %v648 = vadd.f32 0.0, %v647
      %v649 = vpop.f32.mrf.mxu0
      %v650 = vadd.f32 0.0, %v649
      %651 = vmatmul.bf16.gmra.mxu0 %v602
      %v652 = vpop.f32.mrf.mxu0
      %v653 = vadd.f32 0.0, %v652
      %v654 = vpop.f32.mrf.mxu0
      %v655 = vadd.f32 0.0, %v654
      %656 = vdwg.mxu0
      %vm657 = vcmp.gt.f32.partialorder %v638, 0.0
      %vm658 = vcmp.gt.f32.partialorder %v640, 0.0
      %vm659 = vcmp.gt.f32.partialorder %v643, 0.0
      %vm660 = vcmp.gt.f32.partialorder %v645, 0.0
      %vm661 = vcmp.gt.f32.partialorder %v648, 0.0
      %vm662 = vcmp.gt.f32.partialorder %v650, 0.0
      %vm663 = vcmp.gt.f32.partialorder %v653, 0.0
      %vm664 = vcmp.gt.f32.partialorder %v655, 0.0
      %v665 = vsub.f32 %v349, 0.2
      %v666 = vsub.f32 %v350, 0.2
      %v667 = vsub.f32 %v351, 0.2
      %v668 = vsub.f32 %v352, 0.2
      %v669 = vsub.f32 %v353, 0.2
      %v670 = vsub.f32 %v354, 0.2
      %v671 = vsub.f32 %v355, 0.2
      %v672 = vsub.f32 %v356, 0.2
      %674 = vset.pattern.permute.xlu0 0
      %675 = vperm.xlu0 %674, %v665
      %v676 = vpop.permute.xlu0 %675
      %679 = vset.pattern.permute.xlu0 0
      %680 = vperm.xlu0 %679, %v666
      %v681 = vpop.permute.xlu0 %680
      %684 = vset.pattern.permute.xlu0 0
      %685 = vperm.xlu0 %684, %v667
      %v686 = vpop.permute.xlu0 %685
      %689 = vset.pattern.permute.xlu0 0
      %690 = vperm.xlu0 %689, %v668
      %v691 = vpop.permute.xlu0 %690
      %694 = vset.pattern.permute.xlu0 0
      %695 = vperm.xlu0 %694, %v669
      %v696 = vpop.permute.xlu0 %695
      %699 = vset.pattern.permute.xlu0 0
      %700 = vperm.xlu0 %699, %v670
      %v701 = vpop.permute.xlu0 %700
      %704 = vset.pattern.permute.xlu0 0
      %705 = vperm.xlu0 %704, %v671
      %v706 = vpop.permute.xlu0 %705
      %709 = vset.pattern.permute.xlu0 0
      %710 = vperm.xlu0 %709, %v672
      %v711 = vpop.permute.xlu0 %710
      %vm713 = vcmp.ge.f32.partialorder %v488, %v676
      %vm714 = vcmp.ge.f32.partialorder %v490, %v681
      %vm715 = vcmp.ge.f32.partialorder %v493, %v686
      %vm716 = vcmp.ge.f32.partialorder %v495, %v691
      %vm717 = vcmp.ge.f32.partialorder %v498, %v696
      %vm718 = vcmp.ge.f32.partialorder %v500, %v701
      %vm719 = vcmp.ge.f32.partialorder %v503, %v706
      %vm720 = vcmp.ge.f32.partialorder %v505, %v711
      %v721 = vsub.f32 %v488, 1.0
      %v722 = vsub.f32 %v490, 1.0
      %v723 = vsub.f32 %v493, 1.0
      %v724 = vsub.f32 %v495, 1.0
      %v725 = vsub.f32 %v498, 1.0
      %v726 = vsub.f32 %v500, 1.0
      %v727 = vsub.f32 %v503, 1.0
      %v728 = vsub.f32 %v505, 1.0
      %v729 = vsel %vm713, %v488, %v721
      %v730 = vsel %vm714, %v490, %v722
      %v731 = vsel %vm715, %v493, %v723
      %v732 = vsel %vm716, %v495, %v724
      %v733 = vsel %vm717, %v498, %v725
      %v734 = vsel %vm718, %v500, %v726
      %v735 = vsel %vm719, %v503, %v727
      %v736 = vsel %vm720, %v505, %v728
      %v737 = vsel %vm657, 0.0, %v729
      %v738 = vsel %vm658, 0.0, %v730
      %v739 = vsel %vm659, 0.0, %v731
      %v740 = vsel %vm660, 0.0, %v732
      %v741 = vsel %vm661, 0.0, %v733
      %v742 = vsel %vm662, 0.0, %v734
      %v743 = vsel %vm663, 0.0, %v735
      %v744 = vsel %vm664, 0.0, %v736
      %s745 = smul.u32 %s20, 64
      %s746 = sadd.s32 %s21, 1
      %s747 = smul.u32 %s746, 128
      %p748 = scmp.lt.s32.totalorder %s745, %s747
      %s749 = smul.u32 %s21, 128
      %s750 = sadd.s32 %s20, 1
      %s751 = smul.u32 %s750, 64
      %p752 = scmp.lt.s32.totalorder %s749, %s751
      %p753 = pnand %p748, %p752
      %p754 = pneg %p753
      // Predicated region
      $region45: #{tpu_custom_call.1} parent=39 // pred_check
        _
      $region46: #{tpu_custom_call.1} parent=39 // pred_check_branch
        %756 = sbr.rel (%p753) target = $region48
      $region47: #{tpu_custom_call.1} parent=39 // pred_region
        %v757 = vlaneseq
        %v758 = vshrl.u32 %v757, 7
        %v759 = vadd.s32 %v758, 8
        %v760 = vadd.s32 %v758, 16
        %v761 = vadd.s32 %v758, 24
        %v762 = vadd.s32 %v758, 32
        %v763 = vadd.s32 %v758, 40
        %v764 = vadd.s32 %v758, 48
        %v765 = vadd.s32 %v758, 56
        %v766 = vstv %s745
        %v767 = vadd.s32 %v766, %v758
        %v768 = vadd.s32 %v766, %v759
        %v769 = vadd.s32 %v766, %v760
        %v770 = vadd.s32 %v766, %v761
        %v771 = vadd.s32 %v766, %v762
        %v772 = vadd.s32 %v766, %v763
        %v773 = vadd.s32 %v766, %v764
        %v774 = vadd.s32 %v766, %v765
        %v775 = vlaneseq
        %v776 = vand.u32 %v775, 127
        %v777 = vstv %s749
        %v778 = vadd.s32 %v777, %v776
        %vm779 = vcmp.eq.s32.totalorder %v767, %v778
        %vm780 = vcmp.eq.s32.totalorder %v768, %v778
        %vm781 = vcmp.eq.s32.totalorder %v769, %v778
        %vm782 = vcmp.eq.s32.totalorder %v770, %v778
        %vm783 = vcmp.eq.s32.totalorder %v771, %v778
        %vm784 = vcmp.eq.s32.totalorder %v772, %v778
        %vm785 = vcmp.eq.s32.totalorder %v773, %v778
        %vm786 = vcmp.eq.s32.totalorder %v774, %v778
        %v787 = vmax.f32 %v349, 0.0
        %v788 = vmax.f32 %v350, 0.0
        %v789 = vmax.f32 %v351, 0.0
        %v790 = vmax.f32 %v352, 0.0
        %v791 = vmax.f32 %v353, 0.0
        %v792 = vmax.f32 %v354, 0.0
        %v793 = vmax.f32 %v355, 0.0
        %v794 = vmax.f32 %v356, 0.0
        %796 = vset.pattern.permute.xlu0 0
        %797 = vperm.xlu0 %796, %v787
        %v798 = vpop.permute.xlu0 %797
        %801 = vset.pattern.permute.xlu0 0
        %802 = vperm.xlu0 %801, %v788
        %v803 = vpop.permute.xlu0 %802
        %806 = vset.pattern.permute.xlu0 0
        %807 = vperm.xlu0 %806, %v789
        %v808 = vpop.permute.xlu0 %807
        %811 = vset.pattern.permute.xlu0 0
        %812 = vperm.xlu0 %811, %v790
        %v813 = vpop.permute.xlu0 %812
        %816 = vset.pattern.permute.xlu0 0
        %817 = vperm.xlu0 %816, %v791
        %v818 = vpop.permute.xlu0 %817
        %821 = vset.pattern.permute.xlu0 0
        %822 = vperm.xlu0 %821, %v792
        %v823 = vpop.permute.xlu0 %822
        %826 = vset.pattern.permute.xlu0 0
        %827 = vperm.xlu0 %826, %v793
        %v828 = vpop.permute.xlu0 %827
        %831 = vset.pattern.permute.xlu0 0
        %832 = vperm.xlu0 %831, %v794
        %v833 = vpop.permute.xlu0 %832
        %v835 = vsel %vm779, %v798, %v737
        %v836 = vsel %vm780, %v803, %v738
        %v837 = vsel %vm781, %v808, %v739
        %v838 = vsel %vm782, %v813, %v740
        %v839 = vsel %vm783, %v818, %v741
        %v840 = vsel %vm784, %v823, %v742
        %v841 = vsel %vm785, %v828, %v743
        %v842 = vsel %vm786, %v833, %v744
      $region48: #{tpu_custom_call.1} parent=39 // pred_fallthru
        %v843 = vphi 0, %v835
        %v844 = vphi 0, %v836
        %v845 = vphi 0, %v837
        %v846 = vphi 0, %v838
        %v847 = vphi 0, %v839
        %v848 = vphi 0, %v840
        %v849 = vphi 0, %v841
        %v850 = vphi 0, %v842
      // Predicated region
      $region49: #{tpu_custom_call.1} parent=39 // pred_check
        %p851 = pneg %p753
      $region50: #{tpu_custom_call.1} parent=39 // pred_check_branch
        %853 = sbr.rel (%p851) target = $region52
      $region51: #{tpu_custom_call.1} parent=39 // pred_region
        _
      $region52: #{tpu_custom_call.1} parent=39 // pred_fallthru
        %v854 = vphi %v843, %v737
        %v855 = vphi %v844, %v738
        %v856 = vphi %v845, %v739
        %v857 = vphi %v846, %v740
        %v858 = vphi %v847, %v741
        %v859 = vphi %v848, %v742
        %v860 = vphi %v849, %v743
        %v861 = vphi %v850, %v744
      %p862 = scmp.eq.s32.totalorder %s21, 1
      // Predicated region
      $region53: #{tpu_custom_call.1} parent=39 // pred_check
        %p863 = pneg %p862
      $region54: #{tpu_custom_call.1} parent=39 // pred_check_branch
        %865 = sbr.rel (%p863) target = $region56
      $region55: #{tpu_custom_call.1} parent=39 // pred_region
        %v866 = vlaneseq
        %v867 = vand.u32 %v866, 127
        %v868 = vstv %s749
        %v869 = vadd.s32 %v868, %v867
        %vm870 = vcmp.lt.s32.totalorder %v869, 200
        %v871 = vsel %vm870, %v854, -1e+30
        %v872 = vsel %vm870, %v855, -1e+30
        %v873 = vsel %vm870, %v856, -1e+30
        %v874 = vsel %vm870, %v857, -1e+30
        %v875 = vsel %vm870, %v858, -1e+30
        %v876 = vsel %vm870, %v859, -1e+30
        %v877 = vsel %vm870, %v860, -1e+30
        %v878 = vsel %vm870, %v861, -1e+30
      $region56: #{tpu_custom_call.1} parent=39 // pred_fallthru
        %v879 = vphi 0, %v871
        %v880 = vphi 0, %v872
        %v881 = vphi 0, %v873
        %v882 = vphi 0, %v874
        %v883 = vphi 0, %v875
        %v884 = vphi 0, %v876
        %v885 = vphi 0, %v877
        %v886 = vphi 0, %v878
      %p887 = pneg %p862
      // Predicated region
      $region57: #{tpu_custom_call.1} parent=39 // pred_check
        _
      $region58: #{tpu_custom_call.1} parent=39 // pred_check_branch
        %889 = sbr.rel (%p862) target = $region60
      $region59: #{tpu_custom_call.1} parent=39 // pred_region
        _
      $region60: #{tpu_custom_call.1} parent=39 // pred_fallthru
        %v890 = vphi %v879, %v854
        %v891 = vphi %v880, %v855
        %v892 = vphi %v881, %v856
        %v893 = vphi %v882, %v857
        %v894 = vphi %v883, %v858
        %v895 = vphi %v884, %v859
        %v896 = vphi %v885, %v860
        %v897 = vphi %v886, %v861
      %v898 = vld [vmem:[#allocation2] sm:$0xff]
      %v899 = vld [vmem:[#allocation2 + $0x8] sm:$0xff]
      %v900 = vld [vmem:[#allocation2 + $0x10] sm:$0xff]
      %v901 = vld [vmem:[#allocation2 + $0x18] sm:$0xff]
      %v902 = vld [vmem:[#allocation2 + $0x20] sm:$0xff]
      %v903 = vld [vmem:[#allocation2 + $0x28] sm:$0xff]
      %v904 = vld [vmem:[#allocation2 + $0x30] sm:$0xff]
      %v905 = vld [vmem:[#allocation2 + $0x38] sm:$0xff]
      %906 = vmax.xlane.f32.xlu0 %v890
      %v907 = vpop.xlane.xlu0 %906
      %908 = vmax.xlane.f32.xlu0 %v891
      %v909 = vpop.xlane.xlu0 %908
      %910 = vmax.xlane.f32.xlu0 %v892
      %v911 = vpop.xlane.xlu0 %910
      %912 = vmax.xlane.f32.xlu0 %v893
      %v913 = vpop.xlane.xlu0 %912
      %914 = vmax.xlane.f32.xlu0 %v894
      %v915 = vpop.xlane.xlu0 %914
      %916 = vmax.xlane.f32.xlu0 %v895
      %v917 = vpop.xlane.xlu0 %916
      %918 = vmax.xlane.f32.xlu0 %v896
      %v919 = vpop.xlane.xlu0 %918
      %920 = vmax.xlane.f32.xlu0 %v897
      %v921 = vpop.xlane.xlu0 %920
      %v922 = vmax.f32 %v898, %v907
      %v923 = vmax.f32 %v899, %v909
      %v924 = vmax.f32 %v900, %v911
      %v925 = vmax.f32 %v901, %v913
      %v926 = vmax.f32 %v902, %v915
      %v927 = vmax.f32 %v903, %v917
      %v928 = vmax.f32 %v904, %v919
      %v929 = vmax.f32 %v905, %v921
      %v930 = vld [vmem:[#allocation3] sm:$0xff]
      %v931 = vld [vmem:[#allocation3 + $0x8] sm:$0xff]
      %v932 = vld [vmem:[#allocation3 + $0x10] sm:$0xff]
      %v933 = vld [vmem:[#allocation3 + $0x18] sm:$0xff]
      %v934 = vld [vmem:[#allocation3 + $0x20] sm:$0xff]
      %v935 = vld [vmem:[#allocation3 + $0x28] sm:$0xff]
      %v936 = vld [vmem:[#allocation3 + $0x30] sm:$0xff]
      %v937 = vld [vmem:[#allocation3 + $0x38] sm:$0xff]
      %v938 = vsub.f32 %v898, %v922
      %v939 = vsub.f32 %v899, %v923
      %v940 = vsub.f32 %v900, %v924
      %v941 = vsub.f32 %v901, %v925
      %v942 = vsub.f32 %v902, %v926
      %v943 = vsub.f32 %v903, %v927
      %v944 = vsub.f32 %v904, %v928
      %v945 = vsub.f32 %v905, %v929
      %v946 = vmul.f32 %v938, 1.442695
      %v947 = vpow.pop %v946
      %v948 = vmul.f32 %v939, 1.442695
      %v949 = vpow.pop %v948
      %v950 = vmul.f32 %v940, 1.442695
      %v951 = vpow.pop %v950
      %v952 = vmul.f32 %v941, 1.442695
      %v953 = vpow.pop %v952
      %v954 = vmul.f32 %v942, 1.442695
      %v955 = vpow.pop %v954
      %v956 = vmul.f32 %v943, 1.442695
      %v957 = vpow.pop %v956
      %v958 = vmul.f32 %v944, 1.442695
      %v959 = vpow.pop %v958
      %v960 = vmul.f32 %v945, 1.442695
      %v961 = vpow.pop %v960
      %v962 = vmul.f32 %v930, %v947
      %v963 = vmul.f32 %v931, %v949
      %v964 = vmul.f32 %v932, %v951
      %v965 = vmul.f32 %v933, %v953
      %v966 = vmul.f32 %v934, %v955
      %v967 = vmul.f32 %v935, %v957
      %v968 = vmul.f32 %v936, %v959
      %v969 = vmul.f32 %v937, %v961
      %971 = vset.pattern.permute.xlu0 0
      %972 = vperm.xlu0 %971, %v922
      %v973 = vpop.permute.xlu0 %972
      %976 = vset.pattern.permute.xlu0 0
      %977 = vperm.xlu0 %976, %v923
      %v978 = vpop.permute.xlu0 %977
      %981 = vset.pattern.permute.xlu0 0
      %982 = vperm.xlu0 %981, %v924
      %v983 = vpop.permute.xlu0 %982
      %986 = vset.pattern.permute.xlu0 0
      %987 = vperm.xlu0 %986, %v925
      %v988 = vpop.permute.xlu0 %987
      %991 = vset.pattern.permute.xlu0 0
      %992 = vperm.xlu0 %991, %v926
      %v993 = vpop.permute.xlu0 %992
      %996 = vset.pattern.permute.xlu0 0
      %997 = vperm.xlu0 %996, %v927
      %v998 = vpop.permute.xlu0 %997
      %1001 = vset.pattern.permute.xlu0 0
      %1002 = vperm.xlu0 %1001, %v928
      %v1003 = vpop.permute.xlu0 %1002
      %1006 = vset.pattern.permute.xlu0 0
      %1007 = vperm.xlu0 %1006, %v929
      %v1008 = vpop.permute.xlu0 %1007
      %v1010 = vsub.f32 %v890, %v973
      %v1011 = vsub.f32 %v891, %v978
      %v1012 = vsub.f32 %v892, %v983
      %v1013 = vsub.f32 %v893, %v988
      %v1014 = vsub.f32 %v894, %v993
      %v1015 = vsub.f32 %v895, %v998
      %v1016 = vsub.f32 %v896, %v1003
      %v1017 = vsub.f32 %v897, %v1008
      %v1018 = vmul.f32 %v1010, 1.442695
      %v1019 = vpow.pop %v1018
      %v1020 = vmul.f32 %v1011, 1.442695
      %v1021 = vpow.pop %v1020
      %v1022 = vmul.f32 %v1012, 1.442695
      %v1023 = vpow.pop %v1022
      %v1024 = vmul.f32 %v1013, 1.442695
      %v1025 = vpow.pop %v1024
      %v1026 = vmul.f32 %v1014, 1.442695
      %v1027 = vpow.pop %v1026
      %v1028 = vmul.f32 %v1015, 1.442695
      %v1029 = vpow.pop %v1028
      %v1030 = vmul.f32 %v1016, 1.442695
      %v1031 = vpow.pop %v1030
      %v1032 = vmul.f32 %v1017, 1.442695
      %v1033 = vpow.pop %v1032
      %1034 = vadd.xlane.f32.xlu0 %v1019
      %v1035 = vpop.xlane.xlu0 %1034
      %1036 = vadd.xlane.f32.xlu0 %v1021
      %v1037 = vpop.xlane.xlu0 %1036
      %1038 = vadd.xlane.f32.xlu0 %v1023
      %v1039 = vpop.xlane.xlu0 %1038
      %1040 = vadd.xlane.f32.xlu0 %v1025
      %v1041 = vpop.xlane.xlu0 %1040
      %1042 = vadd.xlane.f32.xlu0 %v1027
      %v1043 = vpop.xlane.xlu0 %1042
      %1044 = vadd.xlane.f32.xlu0 %v1029
      %v1045 = vpop.xlane.xlu0 %1044
      %1046 = vadd.xlane.f32.xlu0 %v1031
      %v1047 = vpop.xlane.xlu0 %1046
      %1048 = vadd.xlane.f32.xlu0 %v1033
      %v1049 = vpop.xlane.xlu0 %1048
      %v1050 = vadd.f32 %v962, %v1035
      %v1051 = vadd.f32 %v963, %v1037
      %v1052 = vadd.f32 %v964, %v1039
      %v1053 = vadd.f32 %v965, %v1041
      %v1054 = vadd.f32 %v966, %v1043
      %v1055 = vadd.f32 %v967, %v1045
      %v1056 = vadd.f32 %v968, %v1047
      %v1057 = vadd.f32 %v969, %v1049
      %vm1058 = vcmask 7168
      %1059 = vst.msk [vmem:[#allocation3] sm:$0xff] %vm1058, %v1050
      %1060 = vst.msk [vmem:[#allocation3 + $0x8] sm:$0xff] %vm1058, %v1051
      %1061 = vst.msk [vmem:[#allocation3 + $0x10] sm:$0xff] %vm1058, %v1052
      %1062 = vst.msk [vmem:[#allocation3 + $0x18] sm:$0xff] %vm1058, %v1053
      %1063 = vst.msk [vmem:[#allocation3 + $0x20] sm:$0xff] %vm1058, %v1054
      %1064 = vst.msk [vmem:[#allocation3 + $0x28] sm:$0xff] %vm1058, %v1055
      %1065 = vst.msk [vmem:[#allocation3 + $0x30] sm:$0xff] %vm1058, %v1056
      %1066 = vst.msk [vmem:[#allocation3 + $0x38] sm:$0xff] %vm1058, %v1057
      %1067 = vst.msk [vmem:[#allocation2] sm:$0xff] %vm1058, %v922
      %1068 = vst.msk [vmem:[#allocation2 + $0x8] sm:$0xff] %vm1058, %v923
      %1069 = vst.msk [vmem:[#allocation2 + $0x10] sm:$0xff] %vm1058, %v924
      %1070 = vst.msk [vmem:[#allocation2 + $0x18] sm:$0xff] %vm1058, %v925
      %1071 = vst.msk [vmem:[#allocation2 + $0x20] sm:$0xff] %vm1058, %v926
      %1072 = vst.msk [vmem:[#allocation2 + $0x28] sm:$0xff] %vm1058, %v927
      %1073 = vst.msk [vmem:[#allocation2 + $0x30] sm:$0xff] %vm1058, %v928
      %1074 = vst.msk [vmem:[#allocation2 + $0x38] sm:$0xff] %vm1058, %v929
      // Predicated region
      $region61: #{tpu_custom_call.1} parent=39 // pred_check
        %p1075 = pneg %p862
      $region62: #{tpu_custom_call.1} parent=39 // pred_check_branch
        %1077 = sbr.rel (%p1075) target = $region64
      $region63: #{tpu_custom_call.1} parent=39 // pred_region
        %v1078 = vld [vmem:[#allocation2] sm:$0xff]
        %v1079 = vld [vmem:[#allocation2 + $0x8] sm:$0xff]
        %v1080 = vld [vmem:[#allocation2 + $0x10] sm:$0xff]
        %v1081 = vld [vmem:[#allocation2 + $0x18] sm:$0xff]
        %v1082 = vld [vmem:[#allocation2 + $0x20] sm:$0xff]
        %v1083 = vld [vmem:[#allocation2 + $0x28] sm:$0xff]
        %v1084 = vld [vmem:[#allocation2 + $0x30] sm:$0xff]
        %v1085 = vld [vmem:[#allocation2 + $0x38] sm:$0xff]
        %v1086 = vld [vmem:[#allocation3] sm:$0xff]
        %v1087 = vld [vmem:[#allocation3 + $0x8] sm:$0xff]
        %v1088 = vld [vmem:[#allocation3 + $0x10] sm:$0xff]
        %v1089 = vld [vmem:[#allocation3 + $0x18] sm:$0xff]
        %v1090 = vld [vmem:[#allocation3 + $0x20] sm:$0xff]
        %v1091 = vld [vmem:[#allocation3 + $0x28] sm:$0xff]
        %v1092 = vld [vmem:[#allocation3 + $0x30] sm:$0xff]
        %v1093 = vld [vmem:[#allocation3 + $0x38] sm:$0xff]
        %v1094 = vlog2.pop %v1086
        %v1095 = vmul.f32 %v1094, 0.6931472
        %v1096 = vlog2.pop %v1087
        %v1097 = vmul.f32 %v1096, 0.6931472
        %v1098 = vlog2.pop %v1088
        %v1099 = vmul.f32 %v1098, 0.6931472
        %v1100 = vlog2.pop %v1089
        %v1101 = vmul.f32 %v1100, 0.6931472
        %v1102 = vlog2.pop %v1090
        %v1103 = vmul.f32 %v1102, 0.6931472
        %v1104 = vlog2.pop %v1091
        %v1105 = vmul.f32 %v1104, 0.6931472
        %v1106 = vlog2.pop %v1092
        %v1107 = vmul.f32 %v1106, 0.6931472
        %v1108 = vlog2.pop %v1093
        %v1109 = vmul.f32 %v1108, 0.6931472
        %v1110 = vadd.f32 %v1078, %v1095
        %v1111 = vadd.f32 %v1079, %v1097
        %v1112 = vadd.f32 %v1080, %v1099
        %v1113 = vadd.f32 %v1081, %v1101
        %v1114 = vadd.f32 %v1082, %v1103
        %v1115 = vadd.f32 %v1083, %v1105
        %v1116 = vadd.f32 %v1084, %v1107
        %v1117 = vadd.f32 %v1085, %v1109
        %1118 = vst.msk [vmem:[%s326] sm:$0xff] %vm1058, %v1110
        %1119 = vst.msk [vmem:[%s326 + $0x8] sm:$0xff] %vm1058, %v1111
        %1120 = vst.msk [vmem:[%s326 + $0x10] sm:$0xff] %vm1058, %v1112
        %1121 = vst.msk [vmem:[%s326 + $0x18] sm:$0xff] %vm1058, %v1113
        %1122 = vst.msk [vmem:[%s326 + $0x20] sm:$0xff] %vm1058, %v1114
        %1123 = vst.msk [vmem:[%s326 + $0x28] sm:$0xff] %vm1058, %v1115
        %1124 = vst.msk [vmem:[%s326 + $0x30] sm:$0xff] %vm1058, %v1116
        %1125 = vst.msk [vmem:[%s326 + $0x38] sm:$0xff] %vm1058, %v1117
      $region64: #{tpu_custom_call.1} parent=39 // pred_fallthru
        _
      %s1126 = smul.u32 8, %s20
      %p1127 = scmp.lt.s32.totalorder %s1126, 31
      %s1128 = scalar_select %p1127, %s1126, 31
      %s1129 = smul.addr %s1128, 8
      %s1130 = scalar_lea.vmem %s5, %s1129
      // Predicated region
      $region65: #{tpu_custom_call.1} parent=39 // pred_check
        %p1131 = pneg %p176
      $region66: #{tpu_custom_call.1} parent=39 // pred_check_branch
        %1133 = sbr.rel (%p1131) target = $region68
      $region67: #{tpu_custom_call.1} parent=39 // pred_region
        %s1134 = smul.u32 8, %s20
      $region68: #{tpu_custom_call.1} parent=39 // pred_fallthru
        _
    $region40: #{tpu_custom_call.1} parent=5 // pred_fallthru
      _
    %p1135 = scmp.le.s32.totalorder 2, %s11
    // Predicated region
    $region69: #{tpu_custom_call.1} parent=5 // pred_check
      %p1136 = pneg %p1135
    $region70: #{tpu_custom_call.1} parent=5 // pred_check_branch
      %1138 = sbr.rel (%p1136) target = $region72
    $region71: #{tpu_custom_call.1} parent=5 // pred_region
      %s1139 = ssub.s32 %s11, 2
      // Predicated region
      $region73: #{tpu_custom_call.1} parent=71 // pred_check
        %p1140 = pneg %p182
      $region74: #{tpu_custom_call.1} parent=71 // pred_check_branch
        %1142 = sbr.rel (%p1140) target = $region76
      $region75: #{tpu_custom_call.1} parent=71 // pred_region
        %s1143 = smul.u32 8, %s22
        %p1144 = scmp.lt.s32.totalorder %s1143, 31
        %s1145 = scalar_select %p1144, %s1143, 31
        %s1146 = smul.addr %s1145, 8
        %s1147 = scalar_lea.vmem %s5, %s1146
      $region76: #{tpu_custom_call.1} parent=71 // pred_fallthru
        _
    $region72: #{tpu_custom_call.1} parent=5 // pred_fallthru
      _
  $region6: #{tpu_custom_call.1} parent=0 // loop_footer
    %s15 = sadd.s32 1, %s11
  $region7: #{tpu_custom_call.1} parent=0 // loop_footer_branch
    %10 = sbr.rel target = $region3
  $region8: #{tpu_custom_call.1} parent=0 // loop_exit
    _

</llo_original>
